<compile_context>
chip_gen: v7x
topology: tpu7x:2x2x1
jax: 0.10.0
libtpu: 0.0.40
codegen_flags: <defaults>
</compile_context>

<pallas_src>
import functools

import jax
import jax.numpy as jnp
from jax import lax
from jax.experimental import pallas as pl
from jax.experimental.pallas import tpu as pltpu


def fire_kernel(x_ref, wsq_ref, bsq_ref, wexp_ref, bexp_ref, out_ref, *,
                mxu_dtype):
    rows, Cin = x_ref.shape                     # rows = NB * H * W
    Csq = wsq_ref.shape[1]
    Cout = wexp_ref.shape[1]                    # Cout = 2 * Cexp
    NB, H, WCout = out_ref.shape
    W = WCout // Cout

    x = x_ref[...].astype(jnp.float32)          # (rows, Cin), pixel-major

    # --- squeeze: 1x1 conv + ReLU (one matmul over every pixel in the block) --
    s = jnp.dot(x.astype(mxu_dtype), wsq_ref[...].astype(mxu_dtype),
                preferred_element_type=jnp.float32)
    s = jnp.maximum(s + bsq_ref[...], 0.0)      # (rows, Csq), f32

    # --- zero-pad the squeeze activations spatially, as a VALUE (no scratch) --
    s4 = s.reshape(NB, H, W, Csq)
    zr = jnp.zeros((NB, 1, W, Csq), jnp.float32)
    sp = jnp.concatenate([zr, s4, zr], axis=1)              # (NB, H+2, W,   Csq)
    zc = jnp.zeros((NB, H + 2, 1, Csq), jnp.float32)
    sp = jnp.concatenate([zc, sp, zc], axis=2)              # (NB, H+2, W+2, Csq)

    # --- im2col: 9 shifted windows -> one (rows, 9*Csq) patch matrix ----------
    patches = jnp.concatenate(
        [sp[:, dh:dh + H, dw:dw + W, :] for dh in range(3) for dw in range(3)],
        axis=-1)                                            # (NB, H, W, 9*Csq)
    pm = patches.reshape(rows, 9 * Csq)

    # --- fused expand1x1 + expand3x3: single matmul, columns already ordered
    #     [expand1x1 | expand3x3], then bias + ReLU --------------------------
    e = jnp.dot(pm.astype(mxu_dtype), wexp_ref[...].astype(mxu_dtype),
                preferred_element_type=jnp.float32)
    e = jnp.maximum(e + bexp_ref[...], 0.0)     # (rows, Cout), f32

    # --- identity bypass (static stand-in for the runtime size check) --------
    if Cin == Cout:
        e = e + x                               # f32 add, matches `x += identity`

    # --- lane-dense store: (rows, Cout) -> (NB, H, W*Cout) --------------------
    e4 = e.reshape(NB, H, W, Cout)
    out_lane = jnp.concatenate([e4[:, :, w, :] for w in range(W)], axis=-1)
    out_ref[...] = out_lane.astype(out_ref.dtype)


def _pick_images_per_block(N, HW, target_rows=1024):
    """Largest divisor of N whose block stays <= ~target_rows rows (and keeps
    the row-block a multiple of 8 unless it spans the whole batch)."""
    best = 1
    for d in range(1, N + 1):
        if N % d:
            continue
        if d * HW <= max(target_rows, HW) and ((d * HW) % 8 == 0 or d == N):
            best = d
    # Prefer >=2 grid steps (v7x: 2 TensorCores) when blocks are already large.
    if best == N and N % 2 == 0 and (N // 2) * HW >= 256:
        best = N // 2
    return best


def fire_with_bypass(x_nchw, params, *, mxu_dtype=jnp.float32):
    """x_nchw: (N, Cin, H, W) float32.  Returns (N, 2*Cexp, H, W)."""
    wsq, bsq, we1, be1, we3, be3 = params
    x = jnp.transpose(x_nchw, (0, 2, 3, 1))     # NCHW -> NHWC
    N, H, W, Cin = x.shape
    Csq = wsq.shape[1]
    Cexp = we1.shape[1]
    Cout = 2 * Cexp

    # Fuse expand1x1 into the im2col expand3x3 weight:
    #   cols [0, Cexp)       -> expand1x1 (placed on the centre-tap rows)
    #   cols [Cexp, 2*Cexp)  -> expand3x3
    wexp = jnp.zeros((9 * Csq, Cout), we3.dtype)
    wexp = wexp.at[4 * Csq:5 * Csq, :Cexp].set(we1)
    wexp = wexp.at[:, Cexp:].set(we3.reshape(9 * Csq, Cexp))
    bexp = jnp.concatenate([be1.reshape(1, Cexp), be3.reshape(1, Cexp)], axis=1)

    HW = H * W
    nb = _pick_images_per_block(N, HW)          # images per grid step
    grid = (N // nb,)
    rows_blk = nb * HW

    x_rows = x.reshape(N * HW, Cin)             # free reshape (contiguous)

    out = pl.pallas_call(
        functools.partial(fire_kernel, mxu_dtype=mxu_dtype),
        out_shape=jax.ShapeDtypeStruct((N, H, W * Cout), x.dtype),
        grid_spec=pltpu.PrefetchScalarGridSpec(
            num_scalar_prefetch=0,
            grid=grid,
            in_specs=[
                pl.BlockSpec((rows_blk, Cin), lambda n: (n, 0)),
                pl.BlockSpec((Cin, Csq), lambda n: (0, 0)),
                pl.BlockSpec((1, Csq), lambda n: (0, 0)),
                pl.BlockSpec((9 * Csq, Cout), lambda n: (0, 0)),
                pl.BlockSpec((1, Cout), lambda n: (0, 0)),
            ],
            out_specs=pl.BlockSpec((nb, H, W * Cout), lambda n: (n, 0, 0)),
        ),
        compiler_params=pltpu.CompilerParams(
            dimension_semantics=("parallel",)),
    )(x_rows, wsq, bsq, wexp, bexp)

    out = out.reshape(N, H, W, Cout)            # free reshape
    return jnp.transpose(out, (0, 3, 1, 2))     # NHWC -> NCHW


def reference_fire(x_nchw, params):
    """Plain-JAX reference (mirrors the PyTorch forward exactly)."""
    wsq, bsq, we1, be1, we3, be3 = params
    x = jnp.transpose(x_nchw, (0, 2, 3, 1))
    dn1 = lax.conv_dimension_numbers(x.shape, (1, 1, 1, 1),
                                     ('NHWC', 'HWIO', 'NHWC'))
    s = jax.nn.relu(
        lax.conv_general_dilated(x, wsq.reshape(1, 1, *wsq.shape), (1, 1),
                                 'SAME', dimension_numbers=dn1)
        + bsq.reshape(1, 1, 1, -1))
    e1 = jax.nn.relu(
        lax.conv_general_dilated(s, we1.reshape(1, 1, *we1.shape), (1, 1),
                                 'SAME', dimension_numbers=dn1)
        + be1.reshape(1, 1, 1, -1))
    dn3 = lax.conv_dimension_numbers(s.shape, we3.shape,
                                     ('NHWC', 'HWIO', 'NHWC'))
    e3 = jax.nn.relu(
        lax.conv_general_dilated(s, we3, (1, 1), 'SAME',
                                 dimension_numbers=dn3)
        + be3.reshape(1, 1, 1, -1))
    out = jnp.concatenate([e1, e3], axis=-1)
    if out.shape == x.shape:
        out = out + x
    return jnp.transpose(out, (0, 3, 1, 2))


if __name__ == "__main__":
    # Module hyper-params (small, bypass-compatible): in=32, squeeze=8 -> 6,
    # expand=16 so concat gives 32 channels == in_channels -> bypass adds.
    N, Cin, H, W = 2, 32, 8, 8
    squeeze_channels, expand_channels = 8, 16
    Csq = int(squeeze_channels * 0.75)          # adjusted squeeze channels = 6
    Cexp = expand_channels

    key = jax.random.PRNGKey(0)
    ks = jax.random.split(key, 7)
    wsq = 0.1 * jax.random.normal(ks[0], (Cin, Csq), jnp.float32)
    bsq = 0.1 * jax.random.normal(ks[1], (1, Csq), jnp.float32)
    we1 = 0.1 * jax.random.normal(ks[2], (Csq, Cexp), jnp.float32)
    be1 = 0.1 * jax.random.normal(ks[3], (1, Cexp), jnp.float32)
    we3 = 0.1 * jax.random.normal(ks[4], (3, 3, Csq, Cexp), jnp.float32)
    be3 = 0.1 * jax.random.normal(ks[5], (1, Cexp), jnp.float32)
    params = (wsq, bsq, we1, be1, we3, be3)

    x = jax.random.normal(ks[6], (N, Cin, H, W), jnp.float32)

    fire = jax.jit(fire_with_bypass)
    out = jax.block_until_ready(fire(x, params))

    ref = jax.block_until_ready(reference_fire(x, params))
    assert out.shape == (N, 2 * Cexp, H, W)
    assert jnp.allclose(out, ref, atol=1e-4, rtol=1e-4), "mismatch vs reference"

    print("KERNEL_OK")
</pallas_src>

<mosaic_0001>
module attributes {stable_mosaic.version = 11 : i64} {
  func.func @fire_kernel(%arg0: i32, %arg1: memref<128x32xf32, #tpu.memory_space<vmem>>, %arg2: memref<32x6xf32, #tpu.memory_space<vmem>>, %arg3: memref<1x6xf32, #tpu.memory_space<vmem>>, %arg4: memref<54x32xf32, #tpu.memory_space<vmem>>, %arg5: memref<1x32xf32, #tpu.memory_space<vmem>>, %arg6: memref<2x8x256xf32, #tpu.memory_space<vmem>>) attributes {dimension_semantics = [#tpu.dimension_semantics<parallel>], iteration_bounds = array<i64: 1>, scalar_prefetch = 0 : i64, scratch_operands = 0 : i64, tpu.core_type = #tpu.core_type<tc>, window_params = [{transform_indices = @transform_0, window_bounds = array<i64: 128, 32>}, {pipeline_mode = #tpu.pipeline_mode<synchronous>, transform_indices = @transform_1, window_bounds = array<i64: 32, 6>}, {pipeline_mode = #tpu.pipeline_mode<synchronous>, transform_indices = @transform_2, window_bounds = array<i64: 1, 6>}, {pipeline_mode = #tpu.pipeline_mode<synchronous>, transform_indices = @transform_3, window_bounds = array<i64: 54, 32>}, {pipeline_mode = #tpu.pipeline_mode<synchronous>, transform_indices = @transform_4, window_bounds = array<i64: 1, 32>}, {transform_indices = @transform_5, window_bounds = array<i64: 2, 8, 256>}]} {
    %c0 = arith.constant 0 : index
    %c0_0 = arith.constant 0 : index
    %0 = vector.load %arg1[%c0, %c0_0] : memref<128x32xf32, #tpu.memory_space<vmem>>, vector<128x32xf32>
    %c0_1 = arith.constant 0 : index
    %c0_2 = arith.constant 0 : index
    %1 = vector.load %arg2[%c0_1, %c0_2] : memref<32x6xf32, #tpu.memory_space<vmem>>, vector<32x6xf32>
    %cst = arith.constant dense<0.000000e+00> : vector<128x6xf32>
    %2 = tpu.matmul %0, %1, %cst {dimension_numbers = #tpu.dot_dimension_numbers<[1], [0], [0], [1], [0, 0, 1, 1], [], []>} : vector<128x32xf32>, vector<32x6xf32>, vector<128x6xf32> -> vector<128x6xf32>
    %c0_3 = arith.constant 0 : index
    %c0_4 = arith.constant 0 : index
    %3 = vector.load %arg3[%c0_3, %c0_4] : memref<1x6xf32, #tpu.memory_space<vmem>>, vector<1x6xf32>
    %4 = vector.broadcast %3 : vector<1x6xf32> to vector<128x6xf32>
    %5 = arith.addf %2, %4 : vector<128x6xf32>
    %cst_5 = arith.constant 0.000000e+00 : f32
    %6 = vector.broadcast %cst_5 : f32 to vector<128x6xf32>
    %7 = arith.maximumf %5, %6 : vector<128x6xf32>
    %8 = vector.shape_cast %7 : vector<128x6xf32> to vector<2x8x8x6xf32>
    %cst_6 = arith.constant 0.000000e+00 : f32
    %9 = vector.broadcast %cst_6 : f32 to vector<2x1x8x6xf32>
    %10 = tpu.concatenate %9, %8, %9 in 1 : vector<2x1x8x6xf32>, vector<2x8x8x6xf32>, vector<2x1x8x6xf32> -> vector<2x10x8x6xf32>
    %cst_7 = arith.constant 0.000000e+00 : f32
    %11 = vector.broadcast %cst_7 : f32 to vector<2x10x1x6xf32>
    %12 = tpu.concatenate %11, %10, %11 in 2 : vector<2x10x1x6xf32>, vector<2x10x8x6xf32>, vector<2x10x1x6xf32> -> vector<2x10x10x6xf32>
    %13 = vector.extract_strided_slice %12 {offsets = [0, 0, 0, 0], sizes = [2, 8, 8, 6], strides = [1, 1, 1, 1]} : vector<2x10x10x6xf32> to vector<2x8x8x6xf32>
    %14 = vector.extract_strided_slice %12 {offsets = [0, 0, 1, 0], sizes = [2, 8, 8, 6], strides = [1, 1, 1, 1]} : vector<2x10x10x6xf32> to vector<2x8x8x6xf32>
    %15 = vector.extract_strided_slice %12 {offsets = [0, 0, 2, 0], sizes = [2, 8, 8, 6], strides = [1, 1, 1, 1]} : vector<2x10x10x6xf32> to vector<2x8x8x6xf32>
    %16 = vector.extract_strided_slice %12 {offsets = [0, 1, 0, 0], sizes = [2, 8, 8, 6], strides = [1, 1, 1, 1]} : vector<2x10x10x6xf32> to vector<2x8x8x6xf32>
    %17 = vector.extract_strided_slice %12 {offsets = [0, 1, 1, 0], sizes = [2, 8, 8, 6], strides = [1, 1, 1, 1]} : vector<2x10x10x6xf32> to vector<2x8x8x6xf32>
    %18 = vector.extract_strided_slice %12 {offsets = [0, 1, 2, 0], sizes = [2, 8, 8, 6], strides = [1, 1, 1, 1]} : vector<2x10x10x6xf32> to vector<2x8x8x6xf32>
    %19 = vector.extract_strided_slice %12 {offsets = [0, 2, 0, 0], sizes = [2, 8, 8, 6], strides = [1, 1, 1, 1]} : vector<2x10x10x6xf32> to vector<2x8x8x6xf32>
    %20 = vector.extract_strided_slice %12 {offsets = [0, 2, 1, 0], sizes = [2, 8, 8, 6], strides = [1, 1, 1, 1]} : vector<2x10x10x6xf32> to vector<2x8x8x6xf32>
    %21 = vector.extract_strided_slice %12 {offsets = [0, 2, 2, 0], sizes = [2, 8, 8, 6], strides = [1, 1, 1, 1]} : vector<2x10x10x6xf32> to vector<2x8x8x6xf32>
    %22 = tpu.concatenate %13, %14, %15, %16, %17, %18, %19, %20, %21 in 3 : vector<2x8x8x6xf32>, vector<2x8x8x6xf32>, vector<2x8x8x6xf32>, vector<2x8x8x6xf32>, vector<2x8x8x6xf32>, vector<2x8x8x6xf32>, vector<2x8x8x6xf32>, vector<2x8x8x6xf32>, vector<2x8x8x6xf32> -> vector<2x8x8x54xf32>
    %23 = vector.shape_cast %22 : vector<2x8x8x54xf32> to vector<128x54xf32>
    %c0_8 = arith.constant 0 : index
    %c0_9 = arith.constant 0 : index
    %24 = vector.load %arg4[%c0_8, %c0_9] : memref<54x32xf32, #tpu.memory_space<vmem>>, vector<54x32xf32>
    %cst_10 = arith.constant dense<0.000000e+00> : vector<128x32xf32>
    %25 = tpu.matmul %23, %24, %cst_10 {dimension_numbers = #tpu.dot_dimension_numbers<[1], [0], [0], [1], [0, 0, 1, 1], [], []>} : vector<128x54xf32>, vector<54x32xf32>, vector<128x32xf32> -> vector<128x32xf32>
    %c0_11 = arith.constant 0 : index
    %c0_12 = arith.constant 0 : index
    %26 = vector.load %arg5[%c0_11, %c0_12] : memref<1x32xf32, #tpu.memory_space<vmem>>, vector<1x32xf32>
    %27 = vector.broadcast %26 : vector<1x32xf32> to vector<128x32xf32>
    %28 = arith.addf %25, %27 : vector<128x32xf32>
    %cst_13 = arith.constant 0.000000e+00 : f32
    %29 = vector.broadcast %cst_13 : f32 to vector<128x32xf32>
    %30 = arith.maximumf %28, %29 : vector<128x32xf32>
    %31 = arith.addf %30, %0 : vector<128x32xf32>
    %32 = vector.shape_cast %31 : vector<128x32xf32> to vector<2x8x8x32xf32>
    %33 = vector.extract_strided_slice %32 {offsets = [0, 0, 0, 0], sizes = [2, 8, 1, 32], strides = [1, 1, 1, 1]} : vector<2x8x8x32xf32> to vector<2x8x1x32xf32>
    %34 = vector.shape_cast %33 : vector<2x8x1x32xf32> to vector<2x8x32xf32>
    %35 = vector.extract_strided_slice %32 {offsets = [0, 0, 1, 0], sizes = [2, 8, 1, 32], strides = [1, 1, 1, 1]} : vector<2x8x8x32xf32> to vector<2x8x1x32xf32>
    %36 = vector.shape_cast %35 : vector<2x8x1x32xf32> to vector<2x8x32xf32>
    %37 = vector.extract_strided_slice %32 {offsets = [0, 0, 2, 0], sizes = [2, 8, 1, 32], strides = [1, 1, 1, 1]} : vector<2x8x8x32xf32> to vector<2x8x1x32xf32>
    %38 = vector.shape_cast %37 : vector<2x8x1x32xf32> to vector<2x8x32xf32>
    %39 = vector.extract_strided_slice %32 {offsets = [0, 0, 3, 0], sizes = [2, 8, 1, 32], strides = [1, 1, 1, 1]} : vector<2x8x8x32xf32> to vector<2x8x1x32xf32>
    %40 = vector.shape_cast %39 : vector<2x8x1x32xf32> to vector<2x8x32xf32>
    %41 = vector.extract_strided_slice %32 {offsets = [0, 0, 4, 0], sizes = [2, 8, 1, 32], strides = [1, 1, 1, 1]} : vector<2x8x8x32xf32> to vector<2x8x1x32xf32>
    %42 = vector.shape_cast %41 : vector<2x8x1x32xf32> to vector<2x8x32xf32>
    %43 = vector.extract_strided_slice %32 {offsets = [0, 0, 5, 0], sizes = [2, 8, 1, 32], strides = [1, 1, 1, 1]} : vector<2x8x8x32xf32> to vector<2x8x1x32xf32>
    %44 = vector.shape_cast %43 : vector<2x8x1x32xf32> to vector<2x8x32xf32>
    %45 = vector.extract_strided_slice %32 {offsets = [0, 0, 6, 0], sizes = [2, 8, 1, 32], strides = [1, 1, 1, 1]} : vector<2x8x8x32xf32> to vector<2x8x1x32xf32>
    %46 = vector.shape_cast %45 : vector<2x8x1x32xf32> to vector<2x8x32xf32>
    %47 = vector.extract_strided_slice %32 {offsets = [0, 0, 7, 0], sizes = [2, 8, 1, 32], strides = [1, 1, 1, 1]} : vector<2x8x8x32xf32> to vector<2x8x1x32xf32>
    %48 = vector.shape_cast %47 : vector<2x8x1x32xf32> to vector<2x8x32xf32>
    %49 = tpu.concatenate %34, %36, %38, %40, %42, %44, %46, %48 in 2 : vector<2x8x32xf32>, vector<2x8x32xf32>, vector<2x8x32xf32>, vector<2x8x32xf32>, vector<2x8x32xf32>, vector<2x8x32xf32>, vector<2x8x32xf32>, vector<2x8x32xf32> -> vector<2x8x256xf32>
    %c0_14 = arith.constant 0 : index
    %c0_15 = arith.constant 0 : index
    %c0_16 = arith.constant 0 : index
    %50 = vector.load %arg6[%c0_14, %c0_15, %c0_16] : memref<2x8x256xf32, #tpu.memory_space<vmem>>, vector<2x8x256xf32>
    tpu.vector_store %arg6[%c0_14, %c0_15, %c0_16], %49 {strides = array<i32>} : memref<2x8x256xf32, #tpu.memory_space<vmem>>, vector<2x8x256xf32>,
    return
  }
  func.func @transform_0(%arg0: i32) -> (i32, i32) {
    %c0_i32 = arith.constant 0 : i32
    %c0_i32_0 = arith.constant 0 : i32
    return %arg0, %c0_i32 : i32, i32
  }
  func.func @transform_1(%arg0: i32) -> (i32, i32) {
    %c0_i32 = arith.constant 0 : i32
    %c0_i32_0 = arith.constant 0 : i32
    %c0_i32_1 = arith.constant 0 : i32
    return %c0_i32, %c0_i32_0 : i32, i32
  }
  func.func @transform_2(%arg0: i32) -> (i32, i32) {
    %c0_i32 = arith.constant 0 : i32
    %c0_i32_0 = arith.constant 0 : i32
    %c0_i32_1 = arith.constant 0 : i32
    return %c0_i32, %c0_i32_0 : i32, i32
  }
  func.func @transform_3(%arg0: i32) -> (i32, i32) {
    %c0_i32 = arith.constant 0 : i32
    %c0_i32_0 = arith.constant 0 : i32
    %c0_i32_1 = arith.constant 0 : i32
    return %c0_i32, %c0_i32_0 : i32, i32
  }
  func.func @transform_4(%arg0: i32) -> (i32, i32) {
    %c0_i32 = arith.constant 0 : i32
    %c0_i32_0 = arith.constant 0 : i32
    %c0_i32_1 = arith.constant 0 : i32
    return %c0_i32, %c0_i32_0 : i32, i32
  }
  func.func @transform_5(%arg0: i32) -> (i32, i32, i32) {
    %c0_i32 = arith.constant 0 : i32
    %c0_i32_0 = arith.constant 0 : i32
    %c0_i32_1 = arith.constant 0 : i32
    return %arg0, %c0_i32, %c0_i32_0 : i32, i32, i32
  }
}

</mosaic_0001>

<llo_original>
// kernel: fire_with_bypass.1
$region0: #{fire_with_bypass.1}
  #allocation0 [shape = 'u32[]', space=smem, size = 0x4, offset = 0x4, fixed_abs, tag = 'smem constant byte address 0x4 - core index']
  #allocation1 [shape = 'u32[144,128]{1,0:T(1,128)}', space=vmem, size = 0x12000, scoped, tag = 'internal scratch']
  %s0 = inlined_call_operand.vmem [shape: f32[128,32], index: 0, kind: input, shape index: {}]
  %s1 = inlined_call_operand.vmem [shape: f32[32,6], index: 1, kind: input, shape index: {}]
  %s2 = inlined_call_operand.vmem [shape: f32[1,6], index: 2, kind: input, shape index: {}]
  %s3 = inlined_call_operand.vmem [shape: f32[54,32], index: 3, kind: input, shape index: {}]
  %s4 = inlined_call_operand.vmem [shape: f32[1,32], index: 4, kind: input, shape index: {}]
  %s5 = inlined_call_operand.vmem [shape: f32[2,8,256], index: 5, kind: output, shape index: {}]
  %s6 = sld [smem:[#allocation0]]
  $region30: #{fire_with_bypass.1} parent=0
    _
  %s8 = ssub.s32 1, %s6
  %s9 = scalar_select 0, %s8, %s6
  // Predicated region
  $region2: #{fire_with_bypass.1} parent=0 // pred_check
    _
  $region3: #{fire_with_bypass.1} parent=0 // pred_check_branch
    %11 = sbr.rel (0) target = $region5
  $region4: #{fire_with_bypass.1} parent=0 // pred_region
    _
  $region5: #{fire_with_bypass.1} parent=0 // pred_fallthru
    _
  // Predicated region
  $region6: #{fire_with_bypass.1} parent=0 // pred_check
    _
  $region7: #{fire_with_bypass.1} parent=0 // pred_check_branch
    %13 = sbr.rel (0) target = $region9
  $region8: #{fire_with_bypass.1} parent=0 // pred_region
    _
  $region9: #{fire_with_bypass.1} parent=0 // pred_fallthru
    _
  // Predicated region
  $region10: #{fire_with_bypass.1} parent=0 // pred_check
    _
  $region11: #{fire_with_bypass.1} parent=0 // pred_check_branch
    %15 = sbr.rel (0) target = $region13
  $region12: #{fire_with_bypass.1} parent=0 // pred_region
    _
  $region13: #{fire_with_bypass.1} parent=0 // pred_fallthru
    _
  // Predicated region
  $region14: #{fire_with_bypass.1} parent=0 // pred_check
    _
  $region15: #{fire_with_bypass.1} parent=0 // pred_check_branch
    %17 = sbr.rel (0) target = $region17
  $region16: #{fire_with_bypass.1} parent=0 // pred_region
    _
  $region17: #{fire_with_bypass.1} parent=0 // pred_fallthru
    _
  // Predicated region
  $region18: #{fire_with_bypass.1} parent=0 // pred_check
    _
  $region19: #{fire_with_bypass.1} parent=0 // pred_check_branch
    %19 = sbr.rel (0) target = $region21
  $region20: #{fire_with_bypass.1} parent=0 // pred_region
    _
  $region21: #{fire_with_bypass.1} parent=0 // pred_fallthru
    _
  %v20 = vld [vmem:[%s0] sm:$0xff]
  %v21 = vld [vmem:[%s0 + $0x8] sm:$0xff]
  %v22 = vld [vmem:[%s0 + $0x10] sm:$0xff]
  %v23 = vld [vmem:[%s0 + $0x18] sm:$0xff]
  %v24 = vld [vmem:[%s0 + $0x20] sm:$0xff]
  %v25 = vld [vmem:[%s0 + $0x28] sm:$0xff]
  %v26 = vld [vmem:[%s0 + $0x30] sm:$0xff]
  %v27 = vld [vmem:[%s0 + $0x38] sm:$0xff]
  %v28 = vld [vmem:[%s0 + $0x40] sm:$0xff]
  %v29 = vld [vmem:[%s0 + $0x48] sm:$0xff]
  %v30 = vld [vmem:[%s0 + $0x50] sm:$0xff]
  %v31 = vld [vmem:[%s0 + $0x58] sm:$0xff]
  %v32 = vld [vmem:[%s0 + $0x60] sm:$0xff]
  %v33 = vld [vmem:[%s0 + $0x68] sm:$0xff]
  %v34 = vld [vmem:[%s0 + $0x70] sm:$0xff]
  %v35 = vld [vmem:[%s0 + $0x78] sm:$0xff]
  %v36 = vld [vmem:[%s1] sm:$0xff]
  %v37 = vld [vmem:[%s1 + $0x8] sm:$0xff]
  %v38 = vld [vmem:[%s1 + $0x10] sm:$0xff]
  %v39 = vld [vmem:[%s1 + $0x18] sm:$0xff]
  %v40 = vld [vmem:[%s2] sm:$0x1]
  %v42 = vlaneseq
  %v43 = vshrl.u32 %v42, 7
  %v44 = vsub.s32 0, %v43
  %v45 = vrot.slane %v40, %v44
  %vm47 = vcmask 261120
  %v49 = vsel %vm47, %v20, 0
  %v52 = vsel %vm47, %v21, 0
  %v55 = vsel %vm47, %v22, 0
  %v58 = vsel %vm47, %v23, 0
  %v61 = vsel %vm47, %v24, 0
  %v64 = vsel %vm47, %v25, 0
  %v67 = vsel %vm47, %v26, 0
  %v70 = vsel %vm47, %v27, 0
  %v73 = vsel %vm47, %v28, 0
  %v76 = vsel %vm47, %v29, 0
  %v79 = vsel %vm47, %v30, 0
  %v82 = vsel %vm47, %v31, 0
  %v85 = vsel %vm47, %v32, 0
  %v88 = vsel %vm47, %v33, 0
  %v91 = vsel %vm47, %v34, 0
  %v94 = vsel %vm47, %v35, 0
  %96 = vmatprep.subr.mxu0 0.0
  %97 = vmatpush1.msra.mxu0 %v36
  %98 = vmatprep.subr.mxu0 0.0
  %99 = vmatpush1.msra.mxu0 %v37
  %100 = vmatprep.subr.mxu0 0.0
  %101 = vmatpush1.msra.mxu0 %v38
  %102 = vmatprep.subr.mxu0 0.0
  %103 = vmatpush1.msra.mxu0 %v39
  %104 = vmatprep.subr.mxu0 0.0
  %105 = vmatpush1.msra.mxu0 0.0
  %106 = vmatprep.subr.mxu0 0.0
  %107 = vmatpush1.msra.mxu0 0.0
  %108 = vmatprep.subr.mxu0 0.0
  %109 = vmatpush1.msra.mxu0 0.0
  %110 = vmatprep.subr.mxu0 0.0
  %111 = vmatpush1.msra.mxu0 0.0
  %112 = vmatprep.subr.mxu0 0.0
  %113 = vmatpush1.msra.mxu0 0.0
  %114 = vmatprep.subr.mxu0 0.0
  %115 = vmatpush1.msra.mxu0 0.0
  %116 = vmatprep.subr.mxu0 0.0
  %117 = vmatpush1.msra.mxu0 0.0
  %118 = vmatprep.subr.mxu0 0.0
  %119 = vmatpush1.msra.mxu0 0.0
  %120 = vmatprep.subr.mxu0 0.0
  %121 = vmatpush1.msra.mxu0 0.0
  %122 = vmatprep.subr.mxu0 0.0
  %123 = vmatpush1.msra.mxu0 0.0
  %124 = vmatprep.subr.mxu0 0.0
  %125 = vmatpush1.msra.mxu0 0.0
  %126 = vmatprep.subr.mxu0 0.0
  %127 = vmatpush1.msra.mxu0 0.0
  %128 = vmatprep.subr.mxu0 0.0
  %129 = vmatpush1.msra.mxu0 0.0
  %130 = vmatprep.subr.mxu0 0.0
  %131 = vmatpush1.msra.mxu0 0.0
  %132 = vmatprep.subr.mxu0 0.0
  %133 = vmatpush1.msra.mxu0 0.0
  %134 = vmatprep.subr.mxu0 0.0
  %135 = vmatpush1.msra.mxu0 0.0
  %136 = vmatprep.subr.mxu0 0.0
  %137 = vmatpush1.msra.mxu0 0.0
  %138 = vmatprep.subr.mxu0 0.0
  %139 = vmatpush1.msra.mxu0 0.0
  %140 = vmatprep.subr.mxu0 0.0
  %141 = vmatpush1.msra.mxu0 0.0
  %142 = vmatprep.subr.mxu0 0.0
  %143 = vmatpush1.msra.mxu0 0.0
  %144 = vmatprep.subr.mxu0 0.0
  %145 = vmatpush1.msra.mxu0 0.0
  %146 = vmatprep.subr.mxu0 0.0
  %147 = vmatpush1.msra.mxu0 0.0
  %148 = vmatprep.subr.mxu0 0.0
  %149 = vmatpush1.msra.mxu0 0.0
  %150 = vmatprep.subr.mxu0 0.0
  %151 = vmatpush1.msra.mxu0 0.0
  %152 = vmatprep.subr.mxu0 0.0
  %153 = vmatpush1.msra.mxu0 0.0
  %154 = vmatprep.subr.mxu0 0.0
  %155 = vmatpush1.msra.mxu0 0.0
  %156 = vmatprep.subr.mxu0 0.0
  %157 = vmatpush1.msra.mxu0 0.0
  %158 = vmatprep.subr.mxu0 0.0
  %159 = vmatpush1.msra.mxu0 0.0
  %160 = vmatprep.mubr.f32.mxu0 0.0
  %161 = vmatmul.mubr.f32.gmra.mrb[0].mxu0 %v49
  %v162 = vpop.f32.mrb[0].mxu0
  %v163 = vadd.f32 %v45, %v162
  %v164 = vpop.f32.mrb[0].mxu0
  %165 = vmatprep.mubr.f32.mxu0 0.0
  %166 = vmatmul.mubr.f32.gmra.mrb[0].mxu0 %v52
  %v167 = vpop.f32.mrb[0].mxu0
  %v168 = vadd.f32 %v45, %v167
  %v169 = vpop.f32.mrb[0].mxu0
  %170 = vmatprep.mubr.f32.mxu0 0.0
  %171 = vmatmul.mubr.f32.gmra.mrb[0].mxu0 %v55
  %v172 = vpop.f32.mrb[0].mxu0
  %v173 = vadd.f32 %v45, %v172
  %v174 = vpop.f32.mrb[0].mxu0
  %175 = vmatprep.mubr.f32.mxu0 0.0
  %176 = vmatmul.mubr.f32.gmra.mrb[0].mxu0 %v58
  %v177 = vpop.f32.mrb[0].mxu0
  %v178 = vadd.f32 %v45, %v177
  %v179 = vpop.f32.mrb[0].mxu0
  %180 = vmatprep.mubr.f32.mxu0 0.0
  %181 = vmatmul.mubr.f32.gmra.mrb[0].mxu0 %v61
  %v182 = vpop.f32.mrb[0].mxu0
  %v183 = vadd.f32 %v45, %v182
  %v184 = vpop.f32.mrb[0].mxu0
  %185 = vmatprep.mubr.f32.mxu0 0.0
  %186 = vmatmul.mubr.f32.gmra.mrb[0].mxu0 %v64
  %v187 = vpop.f32.mrb[0].mxu0
  %v188 = vadd.f32 %v45, %v187
  %v189 = vpop.f32.mrb[0].mxu0
  %190 = vmatprep.mubr.f32.mxu0 0.0
  %191 = vmatmul.mubr.f32.gmra.mrb[0].mxu0 %v67
  %v192 = vpop.f32.mrb[0].mxu0
  %v193 = vadd.f32 %v45, %v192
  %v194 = vpop.f32.mrb[0].mxu0
  %195 = vmatprep.mubr.f32.mxu0 0.0
  %196 = vmatmul.mubr.f32.gmra.mrb[0].mxu0 %v70
  %v197 = vpop.f32.mrb[0].mxu0
  %v198 = vadd.f32 %v45, %v197
  %v199 = vpop.f32.mrb[0].mxu0
  %200 = vmatprep.mubr.f32.mxu0 0.0
  %201 = vmatmul.mubr.f32.gmra.mrb[0].mxu0 %v73
  %v202 = vpop.f32.mrb[0].mxu0
  %v203 = vadd.f32 %v45, %v202
  %v204 = vpop.f32.mrb[0].mxu0
  %205 = vmatprep.mubr.f32.mxu0 0.0
  %206 = vmatmul.mubr.f32.gmra.mrb[0].mxu0 %v76
  %v207 = vpop.f32.mrb[0].mxu0
  %v208 = vadd.f32 %v45, %v207
  %v209 = vpop.f32.mrb[0].mxu0
  %210 = vmatprep.mubr.f32.mxu0 0.0
  %211 = vmatmul.mubr.f32.gmra.mrb[0].mxu0 %v79
  %v212 = vpop.f32.mrb[0].mxu0
  %v213 = vadd.f32 %v45, %v212
  %v214 = vpop.f32.mrb[0].mxu0
  %215 = vmatprep.mubr.f32.mxu0 0.0
  %216 = vmatmul.mubr.f32.gmra.mrb[0].mxu0 %v82
  %v217 = vpop.f32.mrb[0].mxu0
  %v218 = vadd.f32 %v45, %v217
  %v219 = vpop.f32.mrb[0].mxu0
  %220 = vmatprep.mubr.f32.mxu0 0.0
  %221 = vmatmul.mubr.f32.gmra.mrb[0].mxu0 %v85
  %v222 = vpop.f32.mrb[0].mxu0
  %v223 = vadd.f32 %v45, %v222
  %v224 = vpop.f32.mrb[0].mxu0
  %225 = vmatprep.mubr.f32.mxu0 0.0
  %226 = vmatmul.mubr.f32.gmra.mrb[0].mxu0 %v88
  %v227 = vpop.f32.mrb[0].mxu0
  %v228 = vadd.f32 %v45, %v227
  %v229 = vpop.f32.mrb[0].mxu0
  %230 = vmatprep.mubr.f32.mxu0 0.0
  %231 = vmatmul.mubr.f32.gmra.mrb[0].mxu0 %v91
  %v232 = vpop.f32.mrb[0].mxu0
  %v233 = vadd.f32 %v45, %v232
  %v234 = vpop.f32.mrb[0].mxu0
  %235 = vmatprep.mubr.f32.mxu0 0.0
  %236 = vmatmul.mubr.f32.gmra.mrb[0].mxu0 %v94
  %v237 = vpop.f32.mrb[0].mxu0
  %v238 = vadd.f32 %v45, %v237
  %v239 = vpop.f32.mrb[0].mxu0
  %240 = vdwg.mxu0
  %v241 = vmax.f32 %v163, 0.0
  %v242 = vmax.f32 %v168, 0.0
  %v243 = vmax.f32 %v173, 0.0
  %v244 = vmax.f32 %v178, 0.0
  %v245 = vmax.f32 %v183, 0.0
  %v246 = vmax.f32 %v188, 0.0
  %v247 = vmax.f32 %v193, 0.0
  %v248 = vmax.f32 %v198, 0.0
  %v249 = vmax.f32 %v203, 0.0
  %v250 = vmax.f32 %v208, 0.0
  %v251 = vmax.f32 %v213, 0.0
  %v252 = vmax.f32 %v218, 0.0
  %v253 = vmax.f32 %v223, 0.0
  %v254 = vmax.f32 %v228, 0.0
  %v255 = vmax.f32 %v233, 0.0
  %v256 = vmax.f32 %v238, 0.0
  %v274 = vrot.slane 0.0, 7
  %v275 = vrot.slane %v241, 7
  %v276 = vrot.slane %v242, 7
  %v277 = vrot.slane %v243, 7
  %v278 = vrot.slane %v244, 7
  %v279 = vrot.slane %v245, 7
  %v280 = vrot.slane %v246, 7
  %v281 = vrot.slane %v247, 7
  %v282 = vrot.slane %v248, 7
  %v283 = vrot.slane %v249, 7
  %v284 = vrot.slane %v250, 7
  %v285 = vrot.slane %v251, 7
  %v286 = vrot.slane %v252, 7
  %v287 = vrot.slane %v253, 7
  %v288 = vrot.slane %v254, 7
  %v289 = vrot.slane %v255, 7
  %v290 = vrot.slane %v256, 7
  %vm308 = vcmask 1040384
  %v309 = vsel %vm308, 0.0, %v274
  %v310 = vsel %vm308, 0.0, %v275
  %v311 = vsel %vm308, 0.0, %v276
  %v312 = vsel %vm308, 0.0, %v277
  %v313 = vsel %vm308, 0.0, %v278
  %v314 = vsel %vm308, 0.0, %v279
  %v315 = vsel %vm308, 0.0, %v280
  %v316 = vsel %vm308, 0.0, %v281
  %v317 = vsel %vm308, 0.0, %v282
  %v318 = vsel %vm308, 0.0, %v283
  %v319 = vsel %vm308, 0.0, %v284
  %v320 = vsel %vm308, 0.0, %v285
  %v321 = vsel %vm308, 0.0, %v286
  %v322 = vsel %vm308, 0.0, %v287
  %v323 = vsel %vm308, 0.0, %v288
  %v324 = vsel %vm308, 0.0, %v289
  %v325 = vsel %vm308, 0.0, %v290
  %v326 = vsel %vm308, %v274, 0.0
  %v327 = vsel %vm308, %v275, 0.0
  %v328 = vsel %vm308, %v276, 0.0
  %v329 = vsel %vm308, %v277, 0.0
  %v330 = vsel %vm308, %v278, 0.0
  %v331 = vsel %vm308, %v279, 0.0
  %v332 = vsel %vm308, %v280, 0.0
  %v333 = vsel %vm308, %v281, 0.0
  %v334 = vsel %vm308, %v282, 0.0
  %v335 = vsel %vm308, %v283, 0.0
  %v336 = vsel %vm308, %v284, 0.0
  %v337 = vsel %vm308, %v285, 0.0
  %v338 = vsel %vm308, %v286, 0.0
  %v339 = vsel %vm308, %v287, 0.0
  %v340 = vsel %vm308, %v288, 0.0
  %v341 = vsel %vm308, %v289, 0.0
  %v342 = vsel %vm308, %v290, 0.0
  %vm373 = vcmask 1046528
  %v374 = vrot.slane %v309, 1
  %v375 = vrot.slane %v326, 1
  %v376 = vsel %vm373, %v374, %v375
  %v377 = vrot.slane %v310, 1
  %v378 = vrot.slane %v327, 1
  %v379 = vsel %vm373, %v377, %v378
  %v380 = vrot.slane %v311, 1
  %v381 = vrot.slane %v328, 1
  %v382 = vsel %vm373, %v380, %v381
  %v383 = vrot.slane %v312, 1
  %v384 = vrot.slane %v329, 1
  %v385 = vsel %vm373, %v383, %v384
  %v386 = vrot.slane %v313, 1
  %v387 = vrot.slane %v330, 1
  %v388 = vsel %vm373, %v386, %v387
  %v389 = vrot.slane %v314, 1
  %v390 = vrot.slane %v331, 1
  %v391 = vsel %vm373, %v389, %v390
  %v392 = vrot.slane %v315, 1
  %v393 = vrot.slane %v332, 1
  %v394 = vsel %vm373, %v392, %v393
  %v395 = vrot.slane %v316, 1
  %v396 = vrot.slane %v333, 1
  %v397 = vsel %vm373, %v395, %v396
  %v398 = vrot.slane %v318, 1
  %v399 = vrot.slane %v335, 1
  %v400 = vsel %vm373, %v398, %v399
  %v401 = vrot.slane %v319, 1
  %v402 = vrot.slane %v336, 1
  %v403 = vsel %vm373, %v401, %v402
  %v404 = vrot.slane %v320, 1
  %v405 = vrot.slane %v337, 1
  %v406 = vsel %vm373, %v404, %v405
  %v407 = vrot.slane %v321, 1
  %v408 = vrot.slane %v338, 1
  %v409 = vsel %vm373, %v407, %v408
  %v410 = vrot.slane %v322, 1
  %v411 = vrot.slane %v339, 1
  %v412 = vsel %vm373, %v410, %v411
  %v413 = vrot.slane %v323, 1
  %v414 = vrot.slane %v340, 1
  %v415 = vsel %vm373, %v413, %v414
  %v416 = vrot.slane %v324, 1
  %v417 = vrot.slane %v341, 1
  %v418 = vsel %vm373, %v416, %v417
  %419 = vrot.lane.b32.xlu0 %v376, 6
  %v420 = vpop.permute.xlu0 %419
  %421 = vrot.lane.b32.xlu0 %v379, 6
  %v422 = vpop.permute.xlu0 %421
  %423 = vrot.lane.b32.xlu0 %v382, 6
  %v424 = vpop.permute.xlu0 %423
  %425 = vrot.lane.b32.xlu0 %v385, 6
  %v426 = vpop.permute.xlu0 %425
  %427 = vrot.lane.b32.xlu0 %v388, 6
  %v428 = vpop.permute.xlu0 %427
  %429 = vrot.lane.b32.xlu0 %v391, 6
  %v430 = vpop.permute.xlu0 %429
  %431 = vrot.lane.b32.xlu0 %v394, 6
  %v432 = vpop.permute.xlu0 %431
  %433 = vrot.lane.b32.xlu0 %v397, 6
  %v434 = vpop.permute.xlu0 %433
  %435 = vrot.lane.b32.xlu0 %v400, 6
  %v436 = vpop.permute.xlu0 %435
  %437 = vrot.lane.b32.xlu0 %v403, 6
  %v438 = vpop.permute.xlu0 %437
  %439 = vrot.lane.b32.xlu0 %v406, 6
  %v440 = vpop.permute.xlu0 %439
  %441 = vrot.lane.b32.xlu0 %v409, 6
  %v442 = vpop.permute.xlu0 %441
  %443 = vrot.lane.b32.xlu0 %v412, 6
  %v444 = vpop.permute.xlu0 %443
  %445 = vrot.lane.b32.xlu0 %v415, 6
  %v446 = vpop.permute.xlu0 %445
  %447 = vrot.lane.b32.xlu0 %v418, 6
  %v448 = vpop.permute.xlu0 %447
  %vm464 = vcmask 1045504
  %v465 = vrot.slane %v309, 2
  %v466 = vrot.slane %v326, 2
  %v467 = vsel %vm464, %v465, %v466
  %v468 = vrot.slane %v310, 2
  %v469 = vrot.slane %v327, 2
  %v470 = vsel %vm464, %v468, %v469
  %v471 = vrot.slane %v311, 2
  %v472 = vrot.slane %v328, 2
  %v473 = vsel %vm464, %v471, %v472
  %v474 = vrot.slane %v312, 2
  %v475 = vrot.slane %v329, 2
  %v476 = vsel %vm464, %v474, %v475
  %v477 = vrot.slane %v313, 2
  %v478 = vrot.slane %v330, 2
  %v479 = vsel %vm464, %v477, %v478
  %v480 = vrot.slane %v314, 2
  %v481 = vrot.slane %v331, 2
  %v482 = vsel %vm464, %v480, %v481
  %v483 = vrot.slane %v315, 2
  %v484 = vrot.slane %v332, 2
  %v485 = vsel %vm464, %v483, %v484
  %v486 = vrot.slane %v316, 2
  %v487 = vrot.slane %v333, 2
  %v488 = vsel %vm464, %v486, %v487
  %v489 = vrot.slane %v318, 2
  %v490 = vrot.slane %v335, 2
  %v491 = vsel %vm464, %v489, %v490
  %v492 = vrot.slane %v319, 2
  %v493 = vrot.slane %v336, 2
  %v494 = vsel %vm464, %v492, %v493
  %v495 = vrot.slane %v320, 2
  %v496 = vrot.slane %v337, 2
  %v497 = vsel %vm464, %v495, %v496
  %v498 = vrot.slane %v321, 2
  %v499 = vrot.slane %v338, 2
  %v500 = vsel %vm464, %v498, %v499
  %v501 = vrot.slane %v322, 2
  %v502 = vrot.slane %v339, 2
  %v503 = vsel %vm464, %v501, %v502
  %v504 = vrot.slane %v323, 2
  %v505 = vrot.slane %v340, 2
  %v506 = vsel %vm464, %v504, %v505
  %v507 = vrot.slane %v324, 2
  %v508 = vrot.slane %v341, 2
  %v509 = vsel %vm464, %v507, %v508
  %510 = vrot.lane.b32.xlu0 %v467, 12
  %v511 = vpop.permute.xlu0 %510
  %512 = vrot.lane.b32.xlu0 %v470, 12
  %v513 = vpop.permute.xlu0 %512
  %514 = vrot.lane.b32.xlu0 %v473, 12
  %v515 = vpop.permute.xlu0 %514
  %516 = vrot.lane.b32.xlu0 %v476, 12
  %v517 = vpop.permute.xlu0 %516
  %518 = vrot.lane.b32.xlu0 %v479, 12
  %v519 = vpop.permute.xlu0 %518
  %520 = vrot.lane.b32.xlu0 %v482, 12
  %v521 = vpop.permute.xlu0 %520
  %522 = vrot.lane.b32.xlu0 %v485, 12
  %v523 = vpop.permute.xlu0 %522
  %524 = vrot.lane.b32.xlu0 %v488, 12
  %v525 = vpop.permute.xlu0 %524
  %526 = vrot.lane.b32.xlu0 %v491, 12
  %v527 = vpop.permute.xlu0 %526
  %528 = vrot.lane.b32.xlu0 %v494, 12
  %v529 = vpop.permute.xlu0 %528
  %530 = vrot.lane.b32.xlu0 %v497, 12
  %v531 = vpop.permute.xlu0 %530
  %532 = vrot.lane.b32.xlu0 %v500, 12
  %v533 = vpop.permute.xlu0 %532
  %534 = vrot.lane.b32.xlu0 %v503, 12
  %v535 = vpop.permute.xlu0 %534
  %536 = vrot.lane.b32.xlu0 %v506, 12
  %v537 = vpop.permute.xlu0 %536
  %538 = vrot.lane.b32.xlu0 %v509, 12
  %v539 = vpop.permute.xlu0 %538
  %557 = vrot.lane.b32.xlu0 %v310, 18
  %v558 = vpop.permute.xlu0 %557
  %559 = vrot.lane.b32.xlu0 %v311, 18
  %v560 = vpop.permute.xlu0 %559
  %561 = vrot.lane.b32.xlu0 %v312, 18
  %v562 = vpop.permute.xlu0 %561
  %563 = vrot.lane.b32.xlu0 %v313, 18
  %v564 = vpop.permute.xlu0 %563
  %565 = vrot.lane.b32.xlu0 %v314, 18
  %v566 = vpop.permute.xlu0 %565
  %567 = vrot.lane.b32.xlu0 %v315, 18
  %v568 = vpop.permute.xlu0 %567
  %569 = vrot.lane.b32.xlu0 %v316, 18
  %v570 = vpop.permute.xlu0 %569
  %571 = vrot.lane.b32.xlu0 %v317, 18
  %v572 = vpop.permute.xlu0 %571
  %573 = vrot.lane.b32.xlu0 %v318, 18
  %v574 = vpop.permute.xlu0 %573
  %575 = vrot.lane.b32.xlu0 %v319, 18
  %v576 = vpop.permute.xlu0 %575
  %577 = vrot.lane.b32.xlu0 %v320, 18
  %v578 = vpop.permute.xlu0 %577
  %579 = vrot.lane.b32.xlu0 %v321, 18
  %v580 = vpop.permute.xlu0 %579
  %581 = vrot.lane.b32.xlu0 %v322, 18
  %v582 = vpop.permute.xlu0 %581
  %583 = vrot.lane.b32.xlu0 %v323, 18
  %v584 = vpop.permute.xlu0 %583
  %585 = vrot.lane.b32.xlu0 %v324, 18
  %v586 = vpop.permute.xlu0 %585
  %587 = vrot.lane.b32.xlu0 %v325, 18
  %v588 = vpop.permute.xlu0 %587
  %v607 = vrot.slane %v317, 1
  %v608 = vrot.slane %v334, 1
  %v609 = vsel %vm373, %v607, %v608
  %v610 = vrot.slane %v325, 1
  %v611 = vrot.slane %v342, 1
  %v612 = vsel %vm373, %v610, %v611
  %613 = vrot.lane.b32.xlu0 %v379, 24
  %v614 = vpop.permute.xlu0 %613
  %615 = vrot.lane.b32.xlu0 %v382, 24
  %v616 = vpop.permute.xlu0 %615
  %617 = vrot.lane.b32.xlu0 %v385, 24
  %v618 = vpop.permute.xlu0 %617
  %619 = vrot.lane.b32.xlu0 %v388, 24
  %v620 = vpop.permute.xlu0 %619
  %621 = vrot.lane.b32.xlu0 %v391, 24
  %v622 = vpop.permute.xlu0 %621
  %623 = vrot.lane.b32.xlu0 %v394, 24
  %v624 = vpop.permute.xlu0 %623
  %625 = vrot.lane.b32.xlu0 %v397, 24
  %v626 = vpop.permute.xlu0 %625
  %627 = vrot.lane.b32.xlu0 %v609, 24
  %v628 = vpop.permute.xlu0 %627
  %629 = vrot.lane.b32.xlu0 %v400, 24
  %v630 = vpop.permute.xlu0 %629
  %631 = vrot.lane.b32.xlu0 %v403, 24
  %v632 = vpop.permute.xlu0 %631
  %633 = vrot.lane.b32.xlu0 %v406, 24
  %v634 = vpop.permute.xlu0 %633
  %635 = vrot.lane.b32.xlu0 %v409, 24
  %v636 = vpop.permute.xlu0 %635
  %637 = vrot.lane.b32.xlu0 %v412, 24
  %v638 = vpop.permute.xlu0 %637
  %639 = vrot.lane.b32.xlu0 %v415, 24
  %v640 = vpop.permute.xlu0 %639
  %641 = vrot.lane.b32.xlu0 %v418, 24
  %v642 = vpop.permute.xlu0 %641
  %643 = vrot.lane.b32.xlu0 %v612, 24
  %v644 = vpop.permute.xlu0 %643
  %v661 = vrot.slane %v317, 2
  %v662 = vrot.slane %v334, 2
  %v663 = vsel %vm464, %v661, %v662
  %v664 = vrot.slane %v325, 2
  %v665 = vrot.slane %v342, 2
  %v666 = vsel %vm464, %v664, %v665
  %667 = vrot.lane.b32.xlu0 %v470, 30
  %v668 = vpop.permute.xlu0 %667
  %669 = vrot.lane.b32.xlu0 %v473, 30
  %v670 = vpop.permute.xlu0 %669
  %671 = vrot.lane.b32.xlu0 %v476, 30
  %v672 = vpop.permute.xlu0 %671
  %673 = vrot.lane.b32.xlu0 %v479, 30
  %v674 = vpop.permute.xlu0 %673
  %675 = vrot.lane.b32.xlu0 %v482, 30
  %v676 = vpop.permute.xlu0 %675
  %677 = vrot.lane.b32.xlu0 %v485, 30
  %v678 = vpop.permute.xlu0 %677
  %679 = vrot.lane.b32.xlu0 %v488, 30
  %v680 = vpop.permute.xlu0 %679
  %681 = vrot.lane.b32.xlu0 %v663, 30
  %v682 = vpop.permute.xlu0 %681
  %683 = vrot.lane.b32.xlu0 %v491, 30
  %v684 = vpop.permute.xlu0 %683
  %685 = vrot.lane.b32.xlu0 %v494, 30
  %v686 = vpop.permute.xlu0 %685
  %687 = vrot.lane.b32.xlu0 %v497, 30
  %v688 = vpop.permute.xlu0 %687
  %689 = vrot.lane.b32.xlu0 %v500, 30
  %v690 = vpop.permute.xlu0 %689
  %691 = vrot.lane.b32.xlu0 %v503, 30
  %v692 = vpop.permute.xlu0 %691
  %693 = vrot.lane.b32.xlu0 %v506, 30
  %v694 = vpop.permute.xlu0 %693
  %695 = vrot.lane.b32.xlu0 %v509, 30
  %v696 = vpop.permute.xlu0 %695
  %697 = vrot.lane.b32.xlu0 %v666, 30
  %v698 = vpop.permute.xlu0 %697
  %715 = vrot.lane.b32.xlu0 %v311, 36
  %v716 = vpop.permute.xlu0 %715
  %717 = vrot.lane.b32.xlu0 %v312, 36
  %v718 = vpop.permute.xlu0 %717
  %719 = vrot.lane.b32.xlu0 %v313, 36
  %v720 = vpop.permute.xlu0 %719
  %721 = vrot.lane.b32.xlu0 %v314, 36
  %v722 = vpop.permute.xlu0 %721
  %723 = vrot.lane.b32.xlu0 %v315, 36
  %v724 = vpop.permute.xlu0 %723
  %725 = vrot.lane.b32.xlu0 %v316, 36
  %v726 = vpop.permute.xlu0 %725
  %727 = vrot.lane.b32.xlu0 %v317, 36
  %v728 = vpop.permute.xlu0 %727
  %729 = vrot.lane.b32.xlu0 %v309, 36
  %v730 = vpop.permute.xlu0 %729
  %731 = vrot.lane.b32.xlu0 %v319, 36
  %v732 = vpop.permute.xlu0 %731
  %733 = vrot.lane.b32.xlu0 %v320, 36
  %v734 = vpop.permute.xlu0 %733
  %735 = vrot.lane.b32.xlu0 %v321, 36
  %v736 = vpop.permute.xlu0 %735
  %737 = vrot.lane.b32.xlu0 %v322, 36
  %v738 = vpop.permute.xlu0 %737
  %739 = vrot.lane.b32.xlu0 %v323, 36
  %v740 = vpop.permute.xlu0 %739
  %741 = vrot.lane.b32.xlu0 %v324, 36
  %v742 = vpop.permute.xlu0 %741
  %743 = vrot.lane.b32.xlu0 %v325, 36
  %v744 = vpop.permute.xlu0 %743
  %760 = vrot.lane.b32.xlu0 %v382, 42
  %v761 = vpop.permute.xlu0 %760
  %762 = vrot.lane.b32.xlu0 %v385, 42
  %v763 = vpop.permute.xlu0 %762
  %764 = vrot.lane.b32.xlu0 %v388, 42
  %v765 = vpop.permute.xlu0 %764
  %766 = vrot.lane.b32.xlu0 %v391, 42
  %v767 = vpop.permute.xlu0 %766
  %768 = vrot.lane.b32.xlu0 %v394, 42
  %v769 = vpop.permute.xlu0 %768
  %770 = vrot.lane.b32.xlu0 %v397, 42
  %v771 = vpop.permute.xlu0 %770
  %772 = vrot.lane.b32.xlu0 %v609, 42
  %v773 = vpop.permute.xlu0 %772
  %774 = vrot.lane.b32.xlu0 %v376, 42
  %v775 = vpop.permute.xlu0 %774
  %776 = vrot.lane.b32.xlu0 %v403, 42
  %v777 = vpop.permute.xlu0 %776
  %778 = vrot.lane.b32.xlu0 %v406, 42
  %v779 = vpop.permute.xlu0 %778
  %780 = vrot.lane.b32.xlu0 %v409, 42
  %v781 = vpop.permute.xlu0 %780
  %782 = vrot.lane.b32.xlu0 %v412, 42
  %v783 = vpop.permute.xlu0 %782
  %784 = vrot.lane.b32.xlu0 %v415, 42
  %v785 = vpop.permute.xlu0 %784
  %786 = vrot.lane.b32.xlu0 %v418, 42
  %v787 = vpop.permute.xlu0 %786
  %788 = vrot.lane.b32.xlu0 %v612, 42
  %v789 = vpop.permute.xlu0 %788
  %805 = vrot.lane.b32.xlu0 %v473, 48
  %v806 = vpop.permute.xlu0 %805
  %807 = vrot.lane.b32.xlu0 %v476, 48
  %v808 = vpop.permute.xlu0 %807
  %809 = vrot.lane.b32.xlu0 %v479, 48
  %v810 = vpop.permute.xlu0 %809
  %811 = vrot.lane.b32.xlu0 %v482, 48
  %v812 = vpop.permute.xlu0 %811
  %813 = vrot.lane.b32.xlu0 %v485, 48
  %v814 = vpop.permute.xlu0 %813
  %815 = vrot.lane.b32.xlu0 %v488, 48
  %v816 = vpop.permute.xlu0 %815
  %817 = vrot.lane.b32.xlu0 %v663, 48
  %v818 = vpop.permute.xlu0 %817
  %819 = vrot.lane.b32.xlu0 %v467, 48
  %v820 = vpop.permute.xlu0 %819
  %821 = vrot.lane.b32.xlu0 %v494, 48
  %v822 = vpop.permute.xlu0 %821
  %823 = vrot.lane.b32.xlu0 %v497, 48
  %v824 = vpop.permute.xlu0 %823
  %825 = vrot.lane.b32.xlu0 %v500, 48
  %v826 = vpop.permute.xlu0 %825
  %827 = vrot.lane.b32.xlu0 %v503, 48
  %v828 = vpop.permute.xlu0 %827
  %829 = vrot.lane.b32.xlu0 %v506, 48
  %v830 = vpop.permute.xlu0 %829
  %831 = vrot.lane.b32.xlu0 %v509, 48
  %v832 = vpop.permute.xlu0 %831
  %833 = vrot.lane.b32.xlu0 %v666, 48
  %v834 = vpop.permute.xlu0 %833
  %vm850 = vcmask 48128
  %v851 = vsel %vm850, %v309, %v420
  %v852 = vsel %vm850, %v310, %v422
  %v853 = vsel %vm850, %v311, %v424
  %v854 = vsel %vm850, %v312, %v426
  %v855 = vsel %vm850, %v313, %v428
  %v856 = vsel %vm850, %v314, %v430
  %v857 = vsel %vm850, %v315, %v432
  %v858 = vsel %vm850, %v316, %v434
  %v859 = vsel %vm850, %v318, %v436
  %v860 = vsel %vm850, %v319, %v438
  %v861 = vsel %vm850, %v320, %v440
  %v862 = vsel %vm850, %v321, %v442
  %v863 = vsel %vm850, %v322, %v444
  %v864 = vsel %vm850, %v323, %v446
  %v865 = vsel %vm850, %v324, %v448
  %vm866 = vcmask 97280
  %v867 = vsel %vm866, %v851, %v511
  %v868 = vsel %vm866, %v852, %v513
  %v869 = vsel %vm866, %v853, %v515
  %v870 = vsel %vm866, %v854, %v517
  %v871 = vsel %vm866, %v855, %v519
  %v872 = vsel %vm866, %v856, %v521
  %v873 = vsel %vm866, %v857, %v523
  %v874 = vsel %vm866, %v858, %v525
  %v875 = vsel %vm866, %v859, %v527
  %v876 = vsel %vm866, %v860, %v529
  %v877 = vsel %vm866, %v861, %v531
  %v878 = vsel %vm866, %v862, %v533
  %v879 = vsel %vm866, %v863, %v535
  %v880 = vsel %vm866, %v864, %v537
  %v881 = vsel %vm866, %v865, %v539
  %vm882 = vcmask 146432
  %v883 = vsel %vm882, %v867, %v558
  %v884 = vsel %vm882, %v868, %v560
  %v885 = vsel %vm882, %v869, %v562
  %v886 = vsel %vm882, %v870, %v564
  %v887 = vsel %vm882, %v871, %v566
  %v888 = vsel %vm882, %v872, %v568
  %v889 = vsel %vm882, %v873, %v570
  %v890 = vsel %vm882, %v874, %v572
  %v891 = vsel %vm882, %v867, %v574
  %v892 = vsel %vm882, %v875, %v576
  %v893 = vsel %vm882, %v876, %v578
  %v894 = vsel %vm882, %v877, %v580
  %v895 = vsel %vm882, %v878, %v582
  %v896 = vsel %vm882, %v879, %v584
  %v897 = vsel %vm882, %v880, %v586
  %v898 = vsel %vm882, %v881, %v588
  %vm899 = vcmask 195584
  %v900 = vsel %vm899, %v883, %v614
  %v901 = vsel %vm899, %v884, %v616
  %v902 = vsel %vm899, %v885, %v618
  %v903 = vsel %vm899, %v886, %v620
  %v904 = vsel %vm899, %v887, %v622
  %v905 = vsel %vm899, %v888, %v624
  %v906 = vsel %vm899, %v889, %v626
  %v907 = vsel %vm899, %v890, %v628
  %v908 = vsel %vm899, %v891, %v630
  %v909 = vsel %vm899, %v892, %v632
  %v910 = vsel %vm899, %v893, %v634
  %v911 = vsel %vm899, %v894, %v636
  %v912 = vsel %vm899, %v895, %v638
  %v913 = vsel %vm899, %v896, %v640
  %v914 = vsel %vm899, %v897, %v642
  %v915 = vsel %vm899, %v898, %v644
  %vm916 = vcmask 244736
  %v917 = vsel %vm916, %v900, %v668
  %v918 = vsel %vm916, %v901, %v670
  %v919 = vsel %vm916, %v902, %v672
  %v920 = vsel %vm916, %v903, %v674
  %v921 = vsel %vm916, %v904, %v676
  %v922 = vsel %vm916, %v905, %v678
  %v923 = vsel %vm916, %v906, %v680
  %v924 = vsel %vm916, %v907, %v682
  %v925 = vsel %vm916, %v908, %v684
  %v926 = vsel %vm916, %v909, %v686
  %v927 = vsel %vm916, %v910, %v688
  %v928 = vsel %vm916, %v911, %v690
  %v929 = vsel %vm916, %v912, %v692
  %v930 = vsel %vm916, %v913, %v694
  %v931 = vsel %vm916, %v914, %v696
  %v932 = vsel %vm916, %v915, %v698
  %vm933 = vcmask 293888
  %v934 = vsel %vm933, %v917, %v716
  %v935 = vsel %vm933, %v918, %v718
  %v936 = vsel %vm933, %v919, %v720
  %v937 = vsel %vm933, %v920, %v722
  %v938 = vsel %vm933, %v921, %v724
  %v939 = vsel %vm933, %v922, %v726
  %v940 = vsel %vm933, %v923, %v728
  %v941 = vsel %vm933, %v924, %v730
  %v942 = vsel %vm933, %v925, %v732
  %v943 = vsel %vm933, %v926, %v734
  %v944 = vsel %vm933, %v927, %v736
  %v945 = vsel %vm933, %v928, %v738
  %v946 = vsel %vm933, %v929, %v740
  %v947 = vsel %vm933, %v930, %v742
  %v948 = vsel %vm933, %v931, %v744
  %v949 = vsel %vm933, %v932, %v730
  %vm950 = vcmask 343040
  %v951 = vsel %vm950, %v934, %v761
  %v952 = vsel %vm950, %v935, %v763
  %v953 = vsel %vm950, %v936, %v765
  %v954 = vsel %vm950, %v937, %v767
  %v955 = vsel %vm950, %v938, %v769
  %v956 = vsel %vm950, %v939, %v771
  %v957 = vsel %vm950, %v940, %v773
  %v958 = vsel %vm950, %v941, %v775
  %v959 = vsel %vm950, %v942, %v777
  %v960 = vsel %vm950, %v943, %v779
  %v961 = vsel %vm950, %v944, %v781
  %v962 = vsel %vm950, %v945, %v783
  %v963 = vsel %vm950, %v946, %v785
  %v964 = vsel %vm950, %v947, %v787
  %v965 = vsel %vm950, %v948, %v789
  %v966 = vsel %vm950, %v949, %v775
  %vm967 = vcmask 392192
  %v968 = vsel %vm967, %v951, %v806
  %v969 = vsel %vm967, %v952, %v808
  %v970 = vsel %vm967, %v953, %v810
  %v971 = vsel %vm967, %v954, %v812
  %v972 = vsel %vm967, %v955, %v814
  %v973 = vsel %vm967, %v956, %v816
  %v974 = vsel %vm967, %v957, %v818
  %v975 = vsel %vm967, %v958, %v820
  %v976 = vsel %vm967, %v959, %v822
  %v977 = vsel %vm967, %v960, %v824
  %v978 = vsel %vm967, %v961, %v826
  %v979 = vsel %vm967, %v962, %v828
  %v980 = vsel %vm967, %v963, %v830
  %v981 = vsel %vm967, %v964, %v832
  %v982 = vsel %vm967, %v965, %v834
  %v983 = vsel %vm967, %v966, %v820
  %v984 = vld [vmem:[%s3] sm:$0xff]
  %v985 = vld [vmem:[%s3 + $0x8] sm:$0xff]
  %v986 = vld [vmem:[%s3 + $0x10] sm:$0xff]
  %v987 = vld [vmem:[%s3 + $0x18] sm:$0xff]
  %v988 = vld [vmem:[%s3 + $0x20] sm:$0xff]
  %v989 = vld [vmem:[%s3 + $0x28] sm:$0xff]
  %v990 = vld [vmem:[%s3 + $0x30] sm:$0x3f]
  %v991 = vld [vmem:[%s4] sm:$0x1]
  %v993 = vlaneseq
  %v994 = vshrl.u32 %v993, 7
  %v995 = vsub.s32 0, %v994
  %v996 = vrot.slane %v991, %v995
  %vm998 = vcmask 441344
  %v1000 = vsel %vm998, %v968, 0
  %v1003 = vsel %vm998, %v969, 0
  %v1006 = vsel %vm998, %v970, 0
  %v1009 = vsel %vm998, %v971, 0
  %v1012 = vsel %vm998, %v972, 0
  %v1015 = vsel %vm998, %v973, 0
  %v1018 = vsel %vm998, %v974, 0
  %v1021 = vsel %vm998, %v975, 0
  %v1024 = vsel %vm998, %v976, 0
  %v1027 = vsel %vm998, %v977, 0
  %v1030 = vsel %vm998, %v978, 0
  %v1033 = vsel %vm998, %v979, 0
  %v1036 = vsel %vm998, %v980, 0
  %v1039 = vsel %vm998, %v981, 0
  %v1042 = vsel %vm998, %v982, 0
  %v1045 = vsel %vm998, %v983, 0
  %v1048 = vsel %vm464, %v990, 0
  %1050 = vmatprep.subr.mxu0 0.0
  %1051 = vmatpush1.msra.mxu0 %v984
  %1052 = vmatprep.subr.mxu0 0.0
  %1053 = vmatpush1.msra.mxu0 %v985
  %1054 = vmatprep.subr.mxu0 0.0
  %1055 = vmatpush1.msra.mxu0 %v986
  %1056 = vmatprep.subr.mxu0 0.0
  %1057 = vmatpush1.msra.mxu0 %v987
  %1058 = vmatprep.subr.mxu0 0.0
  %1059 = vmatpush1.msra.mxu0 %v988
  %1060 = vmatprep.subr.mxu0 0.0
  %1061 = vmatpush1.msra.mxu0 %v989
  %1062 = vmatprep.subr.mxu0 0.0
  %1063 = vmatpush1.msra.mxu0 %v1048
  %1064 = vmatprep.subr.mxu0 0.0
  %1065 = vmatpush1.msra.mxu0 0.0
  %1066 = vmatprep.subr.mxu0 0.0
  %1067 = vmatpush1.msra.mxu0 0.0
  %1068 = vmatprep.subr.mxu0 0.0
  %1069 = vmatpush1.msra.mxu0 0.0
  %1070 = vmatprep.subr.mxu0 0.0
  %1071 = vmatpush1.msra.mxu0 0.0
  %1072 = vmatprep.subr.mxu0 0.0
  %1073 = vmatpush1.msra.mxu0 0.0
  %1074 = vmatprep.subr.mxu0 0.0
  %1075 = vmatpush1.msra.mxu0 0.0
  %1076 = vmatprep.subr.mxu0 0.0
  %1077 = vmatpush1.msra.mxu0 0.0
  %1078 = vmatprep.subr.mxu0 0.0
  %1079 = vmatpush1.msra.mxu0 0.0
  %1080 = vmatprep.subr.mxu0 0.0
  %1081 = vmatpush1.msra.mxu0 0.0
  %1082 = vmatprep.subr.mxu0 0.0
  %1083 = vmatpush1.msra.mxu0 0.0
  %1084 = vmatprep.subr.mxu0 0.0
  %1085 = vmatpush1.msra.mxu0 0.0
  %1086 = vmatprep.subr.mxu0 0.0
  %1087 = vmatpush1.msra.mxu0 0.0
  %1088 = vmatprep.subr.mxu0 0.0
  %1089 = vmatpush1.msra.mxu0 0.0
  %1090 = vmatprep.subr.mxu0 0.0
  %1091 = vmatpush1.msra.mxu0 0.0
  %1092 = vmatprep.subr.mxu0 0.0
  %1093 = vmatpush1.msra.mxu0 0.0
  %1094 = vmatprep.subr.mxu0 0.0
  %1095 = vmatpush1.msra.mxu0 0.0
  %1096 = vmatprep.subr.mxu0 0.0
  %1097 = vmatpush1.msra.mxu0 0.0
  %1098 = vmatprep.subr.mxu0 0.0
  %1099 = vmatpush1.msra.mxu0 0.0
  %1100 = vmatprep.subr.mxu0 0.0
  %1101 = vmatpush1.msra.mxu0 0.0
  %1102 = vmatprep.subr.mxu0 0.0
  %1103 = vmatpush1.msra.mxu0 0.0
  %1104 = vmatprep.subr.mxu0 0.0
  %1105 = vmatpush1.msra.mxu0 0.0
  %1106 = vmatprep.subr.mxu0 0.0
  %1107 = vmatpush1.msra.mxu0 0.0
  %1108 = vmatprep.subr.mxu0 0.0
  %1109 = vmatpush1.msra.mxu0 0.0
  %1110 = vmatprep.subr.mxu0 0.0
  %1111 = vmatpush1.msra.mxu0 0.0
  %1112 = vmatprep.subr.mxu0 0.0
  %1113 = vmatpush1.msra.mxu0 0.0
  %1114 = vmatprep.mubr.f32.mxu0 0.0
  %1115 = vmatmul.mubr.f32.gmra.mrb[0].mxu0 %v1000
  %v1116 = vpop.f32.mrb[0].mxu0
  %v1117 = vadd.f32 %v996, %v1116
  %v1118 = vpop.f32.mrb[0].mxu0
  %1119 = vmatprep.mubr.f32.mxu0 0.0
  %1120 = vmatmul.mubr.f32.gmra.mrb[0].mxu0 %v1003
  %v1121 = vpop.f32.mrb[0].mxu0
  %v1122 = vadd.f32 %v996, %v1121
  %v1123 = vpop.f32.mrb[0].mxu0
  %1124 = vmatprep.mubr.f32.mxu0 0.0
  %1125 = vmatmul.mubr.f32.gmra.mrb[0].mxu0 %v1006
  %v1126 = vpop.f32.mrb[0].mxu0
  %v1127 = vadd.f32 %v996, %v1126
  %v1128 = vpop.f32.mrb[0].mxu0
  %1129 = vmatprep.mubr.f32.mxu0 0.0
  %1130 = vmatmul.mubr.f32.gmra.mrb[0].mxu0 %v1009
  %v1131 = vpop.f32.mrb[0].mxu0
  %v1132 = vadd.f32 %v996, %v1131
  %v1133 = vpop.f32.mrb[0].mxu0
  %1134 = vmatprep.mubr.f32.mxu0 0.0
  %1135 = vmatmul.mubr.f32.gmra.mrb[0].mxu0 %v1012
  %v1136 = vpop.f32.mrb[0].mxu0
  %v1137 = vadd.f32 %v996, %v1136
  %v1138 = vpop.f32.mrb[0].mxu0
  %1139 = vmatprep.mubr.f32.mxu0 0.0
  %1140 = vmatmul.mubr.f32.gmra.mrb[0].mxu0 %v1015
  %v1141 = vpop.f32.mrb[0].mxu0
  %v1142 = vadd.f32 %v996, %v1141
  %v1143 = vpop.f32.mrb[0].mxu0
  %1144 = vmatprep.mubr.f32.mxu0 0.0
  %1145 = vmatmul.mubr.f32.gmra.mrb[0].mxu0 %v1018
  %v1146 = vpop.f32.mrb[0].mxu0
  %v1147 = vadd.f32 %v996, %v1146
  %v1148 = vpop.f32.mrb[0].mxu0
  %1149 = vmatprep.mubr.f32.mxu0 0.0
  %1150 = vmatmul.mubr.f32.gmra.mrb[0].mxu0 %v1021
  %v1151 = vpop.f32.mrb[0].mxu0
  %v1152 = vadd.f32 %v996, %v1151
  %v1153 = vpop.f32.mrb[0].mxu0
  %1154 = vmatprep.mubr.f32.mxu0 0.0
  %1155 = vmatmul.mubr.f32.gmra.mrb[0].mxu0 %v1024
  %v1156 = vpop.f32.mrb[0].mxu0
  %v1157 = vadd.f32 %v996, %v1156
  %v1158 = vpop.f32.mrb[0].mxu0
  %1159 = vmatprep.mubr.f32.mxu0 0.0
  %1160 = vmatmul.mubr.f32.gmra.mrb[0].mxu0 %v1027
  %v1161 = vpop.f32.mrb[0].mxu0
  %v1162 = vadd.f32 %v996, %v1161
  %v1163 = vpop.f32.mrb[0].mxu0
  %1164 = vmatprep.mubr.f32.mxu0 0.0
  %1165 = vmatmul.mubr.f32.gmra.mrb[0].mxu0 %v1030
  %v1166 = vpop.f32.mrb[0].mxu0
  %v1167 = vadd.f32 %v996, %v1166
  %v1168 = vpop.f32.mrb[0].mxu0
  %1169 = vmatprep.mubr.f32.mxu0 0.0
  %1170 = vmatmul.mubr.f32.gmra.mrb[0].mxu0 %v1033
  %v1171 = vpop.f32.mrb[0].mxu0
  %v1172 = vadd.f32 %v996, %v1171
  %v1173 = vpop.f32.mrb[0].mxu0
  %1174 = vmatprep.mubr.f32.mxu0 0.0
  %1175 = vmatmul.mubr.f32.gmra.mrb[0].mxu0 %v1036
  %v1176 = vpop.f32.mrb[0].mxu0
  %v1177 = vadd.f32 %v996, %v1176
  %v1178 = vpop.f32.mrb[0].mxu0
  %1179 = vmatprep.mubr.f32.mxu0 0.0
  %1180 = vmatmul.mubr.f32.gmra.mrb[0].mxu0 %v1039
  %v1181 = vpop.f32.mrb[0].mxu0
  %v1182 = vadd.f32 %v996, %v1181
  %v1183 = vpop.f32.mrb[0].mxu0
  %1184 = vmatprep.mubr.f32.mxu0 0.0
  %1185 = vmatmul.mubr.f32.gmra.mrb[0].mxu0 %v1042
  %v1186 = vpop.f32.mrb[0].mxu0
  %v1187 = vadd.f32 %v996, %v1186
  %v1188 = vpop.f32.mrb[0].mxu0
  %1189 = vmatprep.mubr.f32.mxu0 0.0
  %1190 = vmatmul.mubr.f32.gmra.mrb[0].mxu0 %v1045
  %v1191 = vpop.f32.mrb[0].mxu0
  %v1192 = vadd.f32 %v996, %v1191
  %v1193 = vpop.f32.mrb[0].mxu0
  %1194 = vdwg.mxu0
  %v1195 = vmax.f32 %v1117, 0.0
  %v1196 = vmax.f32 %v1122, 0.0
  %v1197 = vmax.f32 %v1127, 0.0
  %v1198 = vmax.f32 %v1132, 0.0
  %v1199 = vmax.f32 %v1137, 0.0
  %v1200 = vmax.f32 %v1142, 0.0
  %v1201 = vmax.f32 %v1147, 0.0
  %v1202 = vmax.f32 %v1152, 0.0
  %v1203 = vmax.f32 %v1157, 0.0
  %v1204 = vmax.f32 %v1162, 0.0
  %v1205 = vmax.f32 %v1167, 0.0
  %v1206 = vmax.f32 %v1172, 0.0
  %v1207 = vmax.f32 %v1177, 0.0
  %v1208 = vmax.f32 %v1182, 0.0
  %v1209 = vmax.f32 %v1187, 0.0
  %v1210 = vmax.f32 %v1192, 0.0
  %v1211 = vadd.f32 %v1195, %v20
  %v1212 = vadd.f32 %v1196, %v21
  %v1213 = vadd.f32 %v1197, %v22
  %v1214 = vadd.f32 %v1198, %v23
  %v1215 = vadd.f32 %v1199, %v24
  %v1216 = vadd.f32 %v1200, %v25
  %v1217 = vadd.f32 %v1201, %v26
  %v1218 = vadd.f32 %v1202, %v27
  %v1219 = vadd.f32 %v1203, %v28
  %v1220 = vadd.f32 %v1204, %v29
  %v1221 = vadd.f32 %v1205, %v30
  %v1222 = vadd.f32 %v1206, %v31
  %v1223 = vadd.f32 %v1207, %v32
  %v1224 = vadd.f32 %v1208, %v33
  %v1225 = vadd.f32 %v1209, %v34
  %v1226 = vadd.f32 %v1210, %v35
  %v1243 = vrot.slane %v1212, 7
  %vm1244 = vcmask 1041409
  %v1245 = vsel %vm1244, %v1243, %v1211
  %v1246 = vrot.slane %v1213, 6
  %vm1247 = vcmask 1042434
  %v1248 = vsel %vm1247, %v1246, %v1245
  %v1249 = vrot.slane %v1214, 5
  %vm1250 = vcmask 1043459
  %v1251 = vsel %vm1250, %v1249, %v1248
  %v1252 = vrot.slane %v1215, 4
  %vm1253 = vcmask 1044484
  %v1254 = vsel %vm1253, %v1252, %v1251
  %v1255 = vrot.slane %v1216, 3
  %vm1256 = vcmask 1045509
  %v1257 = vsel %vm1256, %v1255, %v1254
  %v1258 = vrot.slane %v1217, 2
  %vm1259 = vcmask 1046534
  %v1260 = vsel %vm1259, %v1258, %v1257
  %v1261 = vrot.slane %v1218, 1
  %vm1262 = vcmask 1047559
  %v1263 = vsel %vm1262, %v1261, %v1260
  %v1264 = vrot.slane %v1220, 7
  %v1265 = vsel %vm1244, %v1264, %v1219
  %v1266 = vrot.slane %v1221, 6
  %v1267 = vsel %vm1247, %v1266, %v1265
  %v1268 = vrot.slane %v1222, 5
  %v1269 = vsel %vm1250, %v1268, %v1267
  %v1270 = vrot.slane %v1223, 4
  %v1271 = vsel %vm1253, %v1270, %v1269
  %v1272 = vrot.slane %v1224, 3
  %v1273 = vsel %vm1256, %v1272, %v1271
  %v1274 = vrot.slane %v1225, 2
  %v1275 = vsel %vm1259, %v1274, %v1273
  %v1276 = vrot.slane %v1226, 1
  %v1277 = vsel %vm1262, %v1276, %v1275
  %v1280 = vrot.slane %v1211, 1
  %v1281 = vsel %vm1244, %v1212, %v1280
  %v1282 = vrot.slane %v1213, 7
  %v1283 = vsel %vm1247, %v1282, %v1281
  %v1284 = vrot.slane %v1214, 6
  %v1285 = vsel %vm1250, %v1284, %v1283
  %v1286 = vrot.slane %v1215, 5
  %v1287 = vsel %vm1253, %v1286, %v1285
  %v1288 = vrot.slane %v1216, 4
  %v1289 = vsel %vm1256, %v1288, %v1287
  %v1290 = vrot.slane %v1217, 3
  %v1291 = vsel %vm1259, %v1290, %v1289
  %v1292 = vrot.slane %v1218, 2
  %v1293 = vsel %vm1262, %v1292, %v1291
  %v1294 = vrot.slane %v1219, 1
  %v1295 = vsel %vm1244, %v1220, %v1294
  %v1296 = vrot.slane %v1221, 7
  %v1297 = vsel %vm1247, %v1296, %v1295
  %v1298 = vrot.slane %v1222, 6
  %v1299 = vsel %vm1250, %v1298, %v1297
  %v1300 = vrot.slane %v1223, 5
  %v1301 = vsel %vm1253, %v1300, %v1299
  %v1302 = vrot.slane %v1224, 4
  %v1303 = vsel %vm1256, %v1302, %v1301
  %v1304 = vrot.slane %v1225, 3
  %v1305 = vsel %vm1259, %v1304, %v1303
  %v1306 = vrot.slane %v1226, 2
  %v1307 = vsel %vm1262, %v1306, %v1305
  %1308 = vrot.lane.b32.xlu0 %v1293, 32
  %v1309 = vpop.permute.xlu0 %1308
  %1310 = vrot.lane.b32.xlu0 %v1307, 32
  %v1311 = vpop.permute.xlu0 %1310
  %v1314 = vrot.slane %v1211, 2
  %v1315 = vrot.slane %v1212, 1
  %v1316 = vsel %vm1244, %v1315, %v1314
  %v1317 = vsel %vm1247, %v1213, %v1316
  %v1318 = vrot.slane %v1214, 7
  %v1319 = vsel %vm1250, %v1318, %v1317
  %v1320 = vrot.slane %v1215, 6
  %v1321 = vsel %vm1253, %v1320, %v1319
  %v1322 = vrot.slane %v1216, 5
  %v1323 = vsel %vm1256, %v1322, %v1321
  %v1324 = vrot.slane %v1217, 4
  %v1325 = vsel %vm1259, %v1324, %v1323
  %v1326 = vrot.slane %v1218, 3
  %v1327 = vsel %vm1262, %v1326, %v1325
  %v1328 = vrot.slane %v1219, 2
  %v1329 = vrot.slane %v1220, 1
  %v1330 = vsel %vm1244, %v1329, %v1328
  %v1331 = vsel %vm1247, %v1221, %v1330
  %v1332 = vrot.slane %v1222, 7
  %v1333 = vsel %vm1250, %v1332, %v1331
  %v1334 = vrot.slane %v1223, 6
  %v1335 = vsel %vm1253, %v1334, %v1333
  %v1336 = vrot.slane %v1224, 5
  %v1337 = vsel %vm1256, %v1336, %v1335
  %v1338 = vrot.slane %v1225, 4
  %v1339 = vsel %vm1259, %v1338, %v1337
  %v1340 = vrot.slane %v1226, 3
  %v1341 = vsel %vm1262, %v1340, %v1339
  %1342 = vrot.lane.b32.xlu0 %v1327, 64
  %v1343 = vpop.permute.xlu0 %1342
  %1344 = vrot.lane.b32.xlu0 %v1341, 64
  %v1345 = vpop.permute.xlu0 %1344
  %v1348 = vrot.slane %v1211, 3
  %v1349 = vrot.slane %v1212, 2
  %v1350 = vsel %vm1244, %v1349, %v1348
  %v1351 = vrot.slane %v1213, 1
  %v1352 = vsel %vm1247, %v1351, %v1350
  %v1353 = vsel %vm1250, %v1214, %v1352
  %v1354 = vrot.slane %v1215, 7
  %v1355 = vsel %vm1253, %v1354, %v1353
  %v1356 = vrot.slane %v1216, 6
  %v1357 = vsel %vm1256, %v1356, %v1355
  %v1358 = vrot.slane %v1217, 5
  %v1359 = vsel %vm1259, %v1358, %v1357
  %v1360 = vrot.slane %v1218, 4
  %v1361 = vsel %vm1262, %v1360, %v1359
  %v1362 = vrot.slane %v1219, 3
  %v1363 = vrot.slane %v1220, 2
  %v1364 = vsel %vm1244, %v1363, %v1362
  %v1365 = vrot.slane %v1221, 1
  %v1366 = vsel %vm1247, %v1365, %v1364
  %v1367 = vsel %vm1250, %v1222, %v1366
  %v1368 = vrot.slane %v1223, 7
  %v1369 = vsel %vm1253, %v1368, %v1367
  %v1370 = vrot.slane %v1224, 6
  %v1371 = vsel %vm1256, %v1370, %v1369
  %v1372 = vrot.slane %v1225, 5
  %v1373 = vsel %vm1259, %v1372, %v1371
  %v1374 = vrot.slane %v1226, 4
  %v1375 = vsel %vm1262, %v1374, %v1373
  %1376 = vrot.lane.b32.xlu0 %v1361, 96
  %v1377 = vpop.permute.xlu0 %1376
  %1378 = vrot.lane.b32.xlu0 %v1375, 96
  %v1379 = vpop.permute.xlu0 %1378
  %v1382 = vrot.slane %v1211, 4
  %v1383 = vrot.slane %v1212, 3
  %v1384 = vsel %vm1244, %v1383, %v1382
  %v1385 = vrot.slane %v1213, 2
  %v1386 = vsel %vm1247, %v1385, %v1384
  %v1387 = vrot.slane %v1214, 1
  %v1388 = vsel %vm1250, %v1387, %v1386
  %v1389 = vsel %vm1253, %v1215, %v1388
  %v1390 = vrot.slane %v1216, 7
  %v1391 = vsel %vm1256, %v1390, %v1389
  %v1392 = vrot.slane %v1217, 6
  %v1393 = vsel %vm1259, %v1392, %v1391
  %v1394 = vrot.slane %v1218, 5
  %v1395 = vsel %vm1262, %v1394, %v1393
  %v1396 = vrot.slane %v1219, 4
  %v1397 = vrot.slane %v1220, 3
  %v1398 = vsel %vm1244, %v1397, %v1396
  %v1399 = vrot.slane %v1221, 2
  %v1400 = vsel %vm1247, %v1399, %v1398
  %v1401 = vrot.slane %v1222, 1
  %v1402 = vsel %vm1250, %v1401, %v1400
  %v1403 = vsel %vm1253, %v1223, %v1402
  %v1404 = vrot.slane %v1224, 7
  %v1405 = vsel %vm1256, %v1404, %v1403
  %v1406 = vrot.slane %v1225, 6
  %v1407 = vsel %vm1259, %v1406, %v1405
  %v1408 = vrot.slane %v1226, 5
  %v1409 = vsel %vm1262, %v1408, %v1407
  %v1412 = vrot.slane %v1211, 5
  %v1413 = vrot.slane %v1212, 4
  %v1414 = vsel %vm1244, %v1413, %v1412
  %v1415 = vrot.slane %v1213, 3
  %v1416 = vsel %vm1247, %v1415, %v1414
  %v1417 = vrot.slane %v1214, 2
  %v1418 = vsel %vm1250, %v1417, %v1416
  %v1419 = vrot.slane %v1215, 1
  %v1420 = vsel %vm1253, %v1419, %v1418
  %v1421 = vsel %vm1256, %v1216, %v1420
  %v1422 = vrot.slane %v1217, 7
  %v1423 = vsel %vm1259, %v1422, %v1421
  %v1424 = vrot.slane %v1218, 6
  %v1425 = vsel %vm1262, %v1424, %v1423
  %v1426 = vrot.slane %v1219, 5
  %v1427 = vrot.slane %v1220, 4
  %v1428 = vsel %vm1244, %v1427, %v1426
  %v1429 = vrot.slane %v1221, 3
  %v1430 = vsel %vm1247, %v1429, %v1428
  %v1431 = vrot.slane %v1222, 2
  %v1432 = vsel %vm1250, %v1431, %v1430
  %v1433 = vrot.slane %v1223, 1
  %v1434 = vsel %vm1253, %v1433, %v1432
  %v1435 = vsel %vm1256, %v1224, %v1434
  %v1436 = vrot.slane %v1225, 7
  %v1437 = vsel %vm1259, %v1436, %v1435
  %v1438 = vrot.slane %v1226, 6
  %v1439 = vsel %vm1262, %v1438, %v1437
  %1440 = vrot.lane.b32.xlu0 %v1425, 32
  %v1441 = vpop.permute.xlu0 %1440
  %1442 = vrot.lane.b32.xlu0 %v1439, 32
  %v1443 = vpop.permute.xlu0 %1442
  %v1446 = vrot.slane %v1211, 6
  %v1447 = vrot.slane %v1212, 5
  %v1448 = vsel %vm1244, %v1447, %v1446
  %v1449 = vrot.slane %v1213, 4
  %v1450 = vsel %vm1247, %v1449, %v1448
  %v1451 = vrot.slane %v1214, 3
  %v1452 = vsel %vm1250, %v1451, %v1450
  %v1453 = vrot.slane %v1215, 2
  %v1454 = vsel %vm1253, %v1453, %v1452
  %v1455 = vrot.slane %v1216, 1
  %v1456 = vsel %vm1256, %v1455, %v1454
  %v1457 = vsel %vm1259, %v1217, %v1456
  %v1458 = vrot.slane %v1218, 7
  %v1459 = vsel %vm1262, %v1458, %v1457
  %v1460 = vrot.slane %v1219, 6
  %v1461 = vrot.slane %v1220, 5
  %v1462 = vsel %vm1244, %v1461, %v1460
  %v1463 = vrot.slane %v1221, 4
  %v1464 = vsel %vm1247, %v1463, %v1462
  %v1465 = vrot.slane %v1222, 3
  %v1466 = vsel %vm1250, %v1465, %v1464
  %v1467 = vrot.slane %v1223, 2
  %v1468 = vsel %vm1253, %v1467, %v1466
  %v1469 = vrot.slane %v1224, 1
  %v1470 = vsel %vm1256, %v1469, %v1468
  %v1471 = vsel %vm1259, %v1225, %v1470
  %v1472 = vrot.slane %v1226, 7
  %v1473 = vsel %vm1262, %v1472, %v1471
  %1474 = vrot.lane.b32.xlu0 %v1459, 64
  %v1475 = vpop.permute.xlu0 %1474
  %1476 = vrot.lane.b32.xlu0 %v1473, 64
  %v1477 = vpop.permute.xlu0 %1476
  %v1480 = vrot.slane %v1211, 7
  %v1481 = vrot.slane %v1212, 6
  %v1482 = vsel %vm1244, %v1481, %v1480
  %v1483 = vrot.slane %v1213, 5
  %v1484 = vsel %vm1247, %v1483, %v1482
  %v1485 = vrot.slane %v1214, 4
  %v1486 = vsel %vm1250, %v1485, %v1484
  %v1487 = vrot.slane %v1215, 3
  %v1488 = vsel %vm1253, %v1487, %v1486
  %v1489 = vrot.slane %v1216, 2
  %v1490 = vsel %vm1256, %v1489, %v1488
  %v1491 = vrot.slane %v1217, 1
  %v1492 = vsel %vm1259, %v1491, %v1490
  %v1493 = vsel %vm1262, %v1218, %v1492
  %v1494 = vrot.slane %v1219, 7
  %v1495 = vrot.slane %v1220, 6
  %v1496 = vsel %vm1244, %v1495, %v1494
  %v1497 = vrot.slane %v1221, 5
  %v1498 = vsel %vm1247, %v1497, %v1496
  %v1499 = vrot.slane %v1222, 4
  %v1500 = vsel %vm1250, %v1499, %v1498
  %v1501 = vrot.slane %v1223, 3
  %v1502 = vsel %vm1253, %v1501, %v1500
  %v1503 = vrot.slane %v1224, 2
  %v1504 = vsel %vm1256, %v1503, %v1502
  %v1505 = vrot.slane %v1225, 1
  %v1506 = vsel %vm1259, %v1505, %v1504
  %v1507 = vsel %vm1262, %v1226, %v1506
  %1508 = vrot.lane.b32.xlu0 %v1493, 96
  %v1509 = vpop.permute.xlu0 %1508
  %1510 = vrot.lane.b32.xlu0 %v1507, 96
  %v1511 = vpop.permute.xlu0 %1510
  %v1514 = vsel %vm47, %v1263, %v1309
  %v1515 = vsel %vm47, %v1277, %v1311
  %vm1516 = vcmask 523264
  %v1517 = vsel %vm1516, %v1514, %v1343
  %v1518 = vsel %vm1516, %v1515, %v1345
  %vm1519 = vcmask 785408
  %v1520 = vsel %vm1519, %v1517, %v1377
  %v1521 = vsel %vm1519, %v1518, %v1379
  %v1522 = vsel %vm47, %v1395, %v1441
  %v1523 = vsel %vm47, %v1409, %v1443
  %v1524 = vsel %vm1516, %v1522, %v1475
  %v1525 = vsel %vm1516, %v1523, %v1477
  %v1526 = vsel %vm1519, %v1524, %v1509
  %v1527 = vsel %vm1519, %v1525, %v1511
  %1528 = vst [vmem:[%s5] sm:$0xff] %v1520
  %1529 = vst [vmem:[%s5 + $0x8] sm:$0xff] %v1526
  %1530 = vst [vmem:[%s5 + $0x10] sm:$0xff] %v1521
  %1531 = vst [vmem:[%s5 + $0x18] sm:$0xff] %v1527
  // Predicated region
  $region22: #{fire_with_bypass.1} parent=0 // pred_check
    _
  $region23: #{fire_with_bypass.1} parent=0 // pred_check_branch
    %1533 = sbr.rel (0) target = $region25
  $region24: #{fire_with_bypass.1} parent=0 // pred_region
    _
  $region25: #{fire_with_bypass.1} parent=0 // pred_fallthru
    _
  // Predicated region
  $region26: #{fire_with_bypass.1} parent=0 // pred_check
    _
  $region27: #{fire_with_bypass.1} parent=0 // pred_check_branch
    %1535 = sbr.rel (0) target = $region29
  $region28: #{fire_with_bypass.1} parent=0 // pred_region
    _
  $region29: #{fire_with_bypass.1} parent=0 // pred_fallthru
    _

</llo_original>
